<compile_context>
chip_gen: v5e
topology: v5e:2x2
jax: 0.10.0
libtpu: 0.0.40
codegen_flags: <defaults>
</compile_context>

<pallas_src>
import jax
import jax.numpy as jnp
from jax.experimental import pallas as pl
from jax.experimental.pallas import tpu as pltpu


def _make_spectral_kernel(b_tile: int, in_channels: int, out_channels: int):
    """Kernel body; the (small, static) tile/channel counts are baked in."""
    Ci = in_channels
    Co = out_channels

    def kernel(x_ref, w_ref, o_ref):
        # x_ref: (b_tile, 2, Ci, S)  float32; axis 1 is (real, imag), lane-dense S
        # w_ref: (2, Ci, Co, S)      float32; batch-invariant (stays resident in VMEM)
        # o_ref: (b_tile, 2, Co, S)  float32
        #
        # Direct complex product, accumulated over input channels:
        #   out_r = sum_i xr_i*wr_i - xi_i*wi_i
        #   out_i = sum_i xr_i*wi_i + xi_i*wr_i
        # Static unrolled loops -> straight-line VPU FMAs on full (Co, S) planes.
        # NOTE: at production channel counts (Co*S accumulators >> 64x4KiB vreg
        # file) add an inner lane-chunk loop over S so acc_r/acc_i stay in vregs.
        for b in range(b_tile):
            acc_r = None
            acc_i = None
            for i in range(Ci):
                xr_i = x_ref[b, 0, i, :][None, :]      # (1, S), broadcast over Co
                xi_i = x_ref[b, 1, i, :][None, :]
                wr_i = w_ref[0, i]                     # (Co, S)
                wi_i = w_ref[1, i]
                if acc_r is None:
                    acc_r = xr_i * wr_i - xi_i * wi_i
                    acc_i = xr_i * wi_i + xi_i * wr_i
                else:
                    acc_r = acc_r + xr_i * wr_i - xi_i * wi_i
                    acc_i = acc_i + xr_i * wi_i + xi_i * wr_i
            # One dense, unmasked store per (real, imag) output plane.
            o_ref[b, 0] = acc_r
            o_ref[b, 1] = acc_i

    return kernel


def _pick_b_tile(batch: int) -> int:
    """Largest batch tile that still leaves >=2 grid steps (megacore on v7x)."""
    if batch < 2:
        return 1
    for t in range(batch // 2, 0, -1):
        if batch % t == 0:
            return t
    return 1


def spectral_mode_mix(x_lo, x_hi, w_ri, out_channels, b_tile=None):
    """Complex einsum 'bixy,ioxy->boxy' for both mode blocks in one Pallas call.

    x_lo, x_hi : complex64 (B, Ci, m1, m2) Fourier-mode slices.
    w_ri       : float32 (2, Ci, Co, S_pad) packed (real, imag) weight planes over
                 the concatenated + flattened + lane-padded mode axis.
    Returns (out_lo, out_hi): complex64 (B, Co, m1, m2).
    """
    B, Ci, m1, m2 = x_lo.shape
    Co = out_channels
    S = 2 * m1 * m2
    S_pad = w_ri.shape[-1]
    if b_tile is None:
        b_tile = _pick_b_tile(B)
    assert B % b_tile == 0

    # Flatten modes, concat lo/hi along the lane axis, pad to S_pad, and pack
    # (real, imag) into one array -> a single x operand and a single output.
    x_cat = jnp.concatenate(
        [x_lo.reshape(B, Ci, m1 * m2), x_hi.reshape(B, Ci, m1 * m2)], axis=-1)
    x_ri = jnp.stack(
        [jnp.real(x_cat), jnp.imag(x_cat)], axis=1).astype(jnp.float32)  # (B,2,Ci,S)
    pad = S_pad - S
    if pad:
        x_ri = jnp.pad(x_ri, ((0, 0), (0, 0), (0, 0), (0, pad)))

    kernel = _make_spectral_kernel(b_tile, Ci, Co)
    out_sds = jax.ShapeDtypeStruct((B, 2, Co, S_pad), jnp.float32)
    grid = (B // b_tile,)

    x_spec = pl.BlockSpec((b_tile, 2, Ci, S_pad), lambda b: (b, 0, 0, 0))
    o_spec = pl.BlockSpec((b_tile, 2, Co, S_pad), lambda b: (b, 0, 0, 0))

    def run(single_buffer_weights: bool):
        w_kwargs = {}
        if single_buffer_weights:
            # Weight block index never changes across the batch grid; a single
            # VMEM buffer suffices (halves weight residency at production sizes).
            w_kwargs["pipeline_mode"] = pl.Buffered(1)
        w_spec = pl.BlockSpec((2, Ci, Co, S_pad), lambda b: (0, 0, 0, 0), **w_kwargs)
        return pl.pallas_call(
            kernel,
            out_shape=out_sds,
            grid_spec=pltpu.PrefetchScalarGridSpec(
                num_scalar_prefetch=0,
                grid=grid,
                in_specs=[x_spec, w_spec],
                out_specs=o_spec,
            ),
            compiler_params=pltpu.CompilerParams(
                dimension_semantics=("parallel",),
                # Plenty at these sizes.  For production channel/mode counts:
                # raise on v5e/v6e (128 MiB physical VMEM); on v7x (64 MiB)
                # prefer adding a Co grid axis that tiles weights/outputs.
                vmem_limit_bytes=32 * 1024 * 1024,
            ),
        )(x_ri, w_ri)

    try:
        o = run(True)
    except Exception:
        # TODO(synk): this JAX build rejected pipeline_mode=pl.Buffered(1); fall
        # back to default double-buffered weights (harmless at these sizes).
        o = run(False)

    out = (o[:, 0, :, :S] + 1j * o[:, 1, :, :S]).astype(jnp.complex64)
    out_lo = out[:, :, : m1 * m2].reshape(B, Co, m1, m2)
    out_hi = out[:, :, m1 * m2:].reshape(B, Co, m1, m2)
    return out_lo, out_hi


class SpectralConv2d:
    """JAX/Pallas port of the PyTorch SpectralConv2d module."""

    def __init__(self, in_channels, out_channels, modes1, modes2, key):
        self.in_channels = in_channels
        self.out_channels = out_channels
        self.modes1 = modes1
        self.modes2 = modes2
        scale = 1.0 / (in_channels * out_channels)
        k1, k2, k3, k4 = jax.random.split(key, 4)
        shp = (in_channels, out_channels, modes1, modes2)
        # torch.rand(..., dtype=torch.cfloat) -> uniform [0,1) real and imag parts.
        self.weights1 = (scale * (jax.random.uniform(k1, shp, jnp.float32)
                                  + 1j * jax.random.uniform(k2, shp, jnp.float32))
                         ).astype(jnp.complex64)
        self.weights2 = (scale * (jax.random.uniform(k3, shp, jnp.float32)
                                  + 1j * jax.random.uniform(k4, shp, jnp.float32))
                         ).astype(jnp.complex64)

        # ---- Precompute lane-dense packed (real, imag) weight planes (once).
        S = 2 * modes1 * modes2
        S_pad = ((S + 127) // 128) * 128
        w_cat = jnp.concatenate(
            [self.weights1.reshape(in_channels, out_channels, modes1 * modes2),
             self.weights2.reshape(in_channels, out_channels, modes1 * modes2)],
            axis=-1)
        w_ri = jnp.stack(
            [jnp.real(w_cat), jnp.imag(w_cat)], axis=0).astype(jnp.float32)
        pad = S_pad - S
        if pad:
            w_ri = jnp.pad(w_ri, ((0, 0), (0, 0), (0, 0), (0, pad)))
        self._w_ri = w_ri                      # (2, Ci, Co, S_pad)
        # TODO(synk): on v6e/v7x, store w_ri (and x) in bfloat16 and upcast inside
        # the kernel (f32 accumulators) to halve weight VMEM/DMA; kept f32 here so
        # v5e (no bf16 VPU path) pays no cast overhead.

    def __call__(self, x):
        # x: (B, Cin, H, W) float32   (NCHW, same as PyTorch)
        B, _, H, W = x.shape
        m1, m2 = self.modes1, self.modes2

        x_ft = jnp.fft.rfft2(x)                          # (B, Cin, H, W//2+1) complex64
        x_lo = x_ft[:, :, :m1, :m2]                      # low positive freqs in H
        x_hi = x_ft[:, :, H - m1:, :m2]                  # negative freqs in H

        out_lo, out_hi = spectral_mode_mix(
            x_lo, x_hi, self._w_ri, self.out_channels)

        out_ft = jnp.zeros((B, self.out_channels, H, W // 2 + 1), dtype=jnp.complex64)
        out_ft = out_ft.at[:, :, :m1, :m2].set(out_lo)
        out_ft = out_ft.at[:, :, H - m1:, :m2].set(out_hi)

        return jnp.fft.irfft2(out_ft, s=(H, W))          # (B, Cout, H, W) float32


if __name__ == "__main__":
    key = jax.random.PRNGKey(0)
    k_x, k_w = jax.random.split(key)

    B, Cin, Cout, H, W = 2, 4, 4, 16, 16
    modes1, modes2 = 4, 4

    x = jax.random.normal(k_x, (B, Cin, H, W), dtype=jnp.float32)

    layer = SpectralConv2d(Cin, Cout, modes1, modes2, k_w)
    out = jax.block_until_ready(layer(x))

    # Pure-JAX reference for a sanity check of the Pallas hot path.
    def ref_forward(x, w1, w2):
        x_ft = jnp.fft.rfft2(x)
        out_ft = jnp.zeros((B, Cout, H, W // 2 + 1), dtype=jnp.complex64)
        lo = jnp.einsum('bixy,ioxy->boxy', x_ft[:, :, :modes1, :modes2], w1)
        hi = jnp.einsum('bixy,ioxy->boxy', x_ft[:, :, H - modes1:, :modes2], w2)
        out_ft = out_ft.at[:, :, :modes1, :modes2].set(lo)
        out_ft = out_ft.at[:, :, H - modes1:, :modes2].set(hi)
        return jnp.fft.irfft2(out_ft, s=(H, W))

    ref = jax.block_until_ready(ref_forward(x, layer.weights1, layer.weights2))
    assert out.shape == (B, Cout, H, W)
    assert jnp.allclose(out, ref, atol=1e-5, rtol=1e-5)

    print("KERNEL_OK")
</pallas_src>

<mosaic_0001>
module attributes {stable_mosaic.version = 11 : i64} {
  func.func @kernel(%arg0: i32, %arg1: memref<1x2x4x128xf32, #tpu.memory_space<vmem>>, %arg2: memref<2x4x4x128xf32, #tpu.memory_space<vmem>>, %arg3: memref<1x2x4x128xf32, #tpu.memory_space<vmem>>) attributes {dimension_semantics = [#tpu.dimension_semantics<parallel>], iteration_bounds = array<i64: 2>, scalar_prefetch = 0 : i64, scratch_operands = 0 : i64, tpu.core_type = #tpu.core_type<tc>, window_params = [{transform_indices = @transform_0, window_bounds = array<i64: 1, 2, 4, 128>}, {pipeline_mode = #tpu.pipeline_mode<synchronous>, transform_indices = @transform_1, window_bounds = array<i64: 2, 4, 4, 128>}, {transform_indices = @transform_2, window_bounds = array<i64: 1, 2, 4, 128>}]} {
    %c0 = arith.constant 0 : index
    %c0_0 = arith.constant 0 : index
    %c0_1 = arith.constant 0 : index
    %c0_2 = arith.constant 0 : index
    %0 = vector.load %arg1[%c0, %c0_0, %c0_1, %c0_2] : memref<1x2x4x128xf32, #tpu.memory_space<vmem>>, vector<1x1x1x128xf32>
    %1 = vector.shape_cast %0 : vector<1x1x1x128xf32> to vector<128xf32>
    %2 = vector.shape_cast %1 : vector<128xf32> to vector<1x128xf32>
    %c0_3 = arith.constant 0 : index
    %c1 = arith.constant 1 : index
    %c0_4 = arith.constant 0 : index
    %c0_5 = arith.constant 0 : index
    %3 = vector.load %arg1[%c0_3, %c1, %c0_4, %c0_5] : memref<1x2x4x128xf32, #tpu.memory_space<vmem>>, vector<1x1x1x128xf32>
    %4 = vector.shape_cast %3 : vector<1x1x1x128xf32> to vector<128xf32>
    %5 = vector.shape_cast %4 : vector<128xf32> to vector<1x128xf32>
    %c0_6 = arith.constant 0 : index
    %c0_7 = arith.constant 0 : index
    %c0_8 = arith.constant 0 : index
    %c0_9 = arith.constant 0 : index
    %6 = vector.load %arg2[%c0_6, %c0_7, %c0_8, %c0_9] : memref<2x4x4x128xf32, #tpu.memory_space<vmem>>, vector<1x1x4x128xf32>
    %7 = vector.shape_cast %6 : vector<1x1x4x128xf32> to vector<4x128xf32>
    %c1_10 = arith.constant 1 : index
    %c0_11 = arith.constant 0 : index
    %c0_12 = arith.constant 0 : index
    %c0_13 = arith.constant 0 : index
    %8 = vector.load %arg2[%c1_10, %c0_11, %c0_12, %c0_13] : memref<2x4x4x128xf32, #tpu.memory_space<vmem>>, vector<1x1x4x128xf32>
    %9 = vector.shape_cast %8 : vector<1x1x4x128xf32> to vector<4x128xf32>
    %10 = vector.broadcast %2 : vector<1x128xf32> to vector<4x128xf32>
    %11 = arith.mulf %10, %7 : vector<4x128xf32>
    %12 = vector.broadcast %5 : vector<1x128xf32> to vector<4x128xf32>
    %13 = arith.mulf %12, %9 : vector<4x128xf32>
    %14 = arith.subf %11, %13 : vector<4x128xf32>
    %15 = vector.broadcast %2 : vector<1x128xf32> to vector<4x128xf32>
    %16 = arith.mulf %15, %9 : vector<4x128xf32>
    %17 = vector.broadcast %5 : vector<1x128xf32> to vector<4x128xf32>
    %18 = arith.mulf %17, %7 : vector<4x128xf32>
    %19 = arith.addf %16, %18 : vector<4x128xf32>
    %c0_14 = arith.constant 0 : index
    %c0_15 = arith.constant 0 : index
    %c1_16 = arith.constant 1 : index
    %c0_17 = arith.constant 0 : index
    %20 = vector.load %arg1[%c0_14, %c0_15, %c1_16, %c0_17] : memref<1x2x4x128xf32, #tpu.memory_space<vmem>>, vector<1x1x1x128xf32>
    %21 = vector.shape_cast %20 : vector<1x1x1x128xf32> to vector<128xf32>
    %22 = vector.shape_cast %21 : vector<128xf32> to vector<1x128xf32>
    %c0_18 = arith.constant 0 : index
    %c1_19 = arith.constant 1 : index
    %c1_20 = arith.constant 1 : index
    %c0_21 = arith.constant 0 : index
    %23 = vector.load %arg1[%c0_18, %c1_19, %c1_20, %c0_21] : memref<1x2x4x128xf32, #tpu.memory_space<vmem>>, vector<1x1x1x128xf32>
    %24 = vector.shape_cast %23 : vector<1x1x1x128xf32> to vector<128xf32>
    %25 = vector.shape_cast %24 : vector<128xf32> to vector<1x128xf32>
    %c0_22 = arith.constant 0 : index
    %c1_23 = arith.constant 1 : index
    %c0_24 = arith.constant 0 : index
    %c0_25 = arith.constant 0 : index
    %26 = vector.load %arg2[%c0_22, %c1_23, %c0_24, %c0_25] : memref<2x4x4x128xf32, #tpu.memory_space<vmem>>, vector<1x1x4x128xf32>
    %27 = vector.shape_cast %26 : vector<1x1x4x128xf32> to vector<4x128xf32>
    %c1_26 = arith.constant 1 : index
    %c1_27 = arith.constant 1 : index
    %c0_28 = arith.constant 0 : index
    %c0_29 = arith.constant 0 : index
    %28 = vector.load %arg2[%c1_26, %c1_27, %c0_28, %c0_29] : memref<2x4x4x128xf32, #tpu.memory_space<vmem>>, vector<1x1x4x128xf32>
    %29 = vector.shape_cast %28 : vector<1x1x4x128xf32> to vector<4x128xf32>
    %30 = vector.broadcast %22 : vector<1x128xf32> to vector<4x128xf32>
    %31 = arith.mulf %30, %27 : vector<4x128xf32>
    %32 = arith.addf %14, %31 : vector<4x128xf32>
    %33 = vector.broadcast %25 : vector<1x128xf32> to vector<4x128xf32>
    %34 = arith.mulf %33, %29 : vector<4x128xf32>
    %35 = arith.subf %32, %34 : vector<4x128xf32>
    %36 = vector.broadcast %22 : vector<1x128xf32> to vector<4x128xf32>
    %37 = arith.mulf %36, %29 : vector<4x128xf32>
    %38 = arith.addf %19, %37 : vector<4x128xf32>
    %39 = vector.broadcast %25 : vector<1x128xf32> to vector<4x128xf32>
    %40 = arith.mulf %39, %27 : vector<4x128xf32>
    %41 = arith.addf %38, %40 : vector<4x128xf32>
    %c0_30 = arith.constant 0 : index
    %c0_31 = arith.constant 0 : index
    %c2 = arith.constant 2 : index
    %c0_32 = arith.constant 0 : index
    %42 = vector.load %arg1[%c0_30, %c0_31, %c2, %c0_32] : memref<1x2x4x128xf32, #tpu.memory_space<vmem>>, vector<1x1x1x128xf32>
    %43 = vector.shape_cast %42 : vector<1x1x1x128xf32> to vector<128xf32>
    %44 = vector.shape_cast %43 : vector<128xf32> to vector<1x128xf32>
    %c0_33 = arith.constant 0 : index
    %c1_34 = arith.constant 1 : index
    %c2_35 = arith.constant 2 : index
    %c0_36 = arith.constant 0 : index
    %45 = vector.load %arg1[%c0_33, %c1_34, %c2_35, %c0_36] : memref<1x2x4x128xf32, #tpu.memory_space<vmem>>, vector<1x1x1x128xf32>
    %46 = vector.shape_cast %45 : vector<1x1x1x128xf32> to vector<128xf32>
    %47 = vector.shape_cast %46 : vector<128xf32> to vector<1x128xf32>
    %c0_37 = arith.constant 0 : index
    %c2_38 = arith.constant 2 : index
    %c0_39 = arith.constant 0 : index
    %c0_40 = arith.constant 0 : index
    %48 = vector.load %arg2[%c0_37, %c2_38, %c0_39, %c0_40] : memref<2x4x4x128xf32, #tpu.memory_space<vmem>>, vector<1x1x4x128xf32>
    %49 = vector.shape_cast %48 : vector<1x1x4x128xf32> to vector<4x128xf32>
    %c1_41 = arith.constant 1 : index
    %c2_42 = arith.constant 2 : index
    %c0_43 = arith.constant 0 : index
    %c0_44 = arith.constant 0 : index
    %50 = vector.load %arg2[%c1_41, %c2_42, %c0_43, %c0_44] : memref<2x4x4x128xf32, #tpu.memory_space<vmem>>, vector<1x1x4x128xf32>
    %51 = vector.shape_cast %50 : vector<1x1x4x128xf32> to vector<4x128xf32>
    %52 = vector.broadcast %44 : vector<1x128xf32> to vector<4x128xf32>
    %53 = arith.mulf %52, %49 : vector<4x128xf32>
    %54 = arith.addf %35, %53 : vector<4x128xf32>
    %55 = vector.broadcast %47 : vector<1x128xf32> to vector<4x128xf32>
    %56 = arith.mulf %55, %51 : vector<4x128xf32>
    %57 = arith.subf %54, %56 : vector<4x128xf32>
    %58 = vector.broadcast %44 : vector<1x128xf32> to vector<4x128xf32>
    %59 = arith.mulf %58, %51 : vector<4x128xf32>
    %60 = arith.addf %41, %59 : vector<4x128xf32>
    %61 = vector.broadcast %47 : vector<1x128xf32> to vector<4x128xf32>
    %62 = arith.mulf %61, %49 : vector<4x128xf32>
    %63 = arith.addf %60, %62 : vector<4x128xf32>
    %c0_45 = arith.constant 0 : index
    %c0_46 = arith.constant 0 : index
    %c3 = arith.constant 3 : index
    %c0_47 = arith.constant 0 : index
    %64 = vector.load %arg1[%c0_45, %c0_46, %c3, %c0_47] : memref<1x2x4x128xf32, #tpu.memory_space<vmem>>, vector<1x1x1x128xf32>
    %65 = vector.shape_cast %64 : vector<1x1x1x128xf32> to vector<128xf32>
    %66 = vector.shape_cast %65 : vector<128xf32> to vector<1x128xf32>
    %c0_48 = arith.constant 0 : index
    %c1_49 = arith.constant 1 : index
    %c3_50 = arith.constant 3 : index
    %c0_51 = arith.constant 0 : index
    %67 = vector.load %arg1[%c0_48, %c1_49, %c3_50, %c0_51] : memref<1x2x4x128xf32, #tpu.memory_space<vmem>>, vector<1x1x1x128xf32>
    %68 = vector.shape_cast %67 : vector<1x1x1x128xf32> to vector<128xf32>
    %69 = vector.shape_cast %68 : vector<128xf32> to vector<1x128xf32>
    %c0_52 = arith.constant 0 : index
    %c3_53 = arith.constant 3 : index
    %c0_54 = arith.constant 0 : index
    %c0_55 = arith.constant 0 : index
    %70 = vector.load %arg2[%c0_52, %c3_53, %c0_54, %c0_55] : memref<2x4x4x128xf32, #tpu.memory_space<vmem>>, vector<1x1x4x128xf32>
    %71 = vector.shape_cast %70 : vector<1x1x4x128xf32> to vector<4x128xf32>
    %c1_56 = arith.constant 1 : index
    %c3_57 = arith.constant 3 : index
    %c0_58 = arith.constant 0 : index
    %c0_59 = arith.constant 0 : index
    %72 = vector.load %arg2[%c1_56, %c3_57, %c0_58, %c0_59] : memref<2x4x4x128xf32, #tpu.memory_space<vmem>>, vector<1x1x4x128xf32>
    %73 = vector.shape_cast %72 : vector<1x1x4x128xf32> to vector<4x128xf32>
    %74 = vector.broadcast %66 : vector<1x128xf32> to vector<4x128xf32>
    %75 = arith.mulf %74, %71 : vector<4x128xf32>
    %76 = arith.addf %57, %75 : vector<4x128xf32>
    %77 = vector.broadcast %69 : vector<1x128xf32> to vector<4x128xf32>
    %78 = arith.mulf %77, %73 : vector<4x128xf32>
    %79 = arith.subf %76, %78 : vector<4x128xf32>
    %80 = vector.broadcast %66 : vector<1x128xf32> to vector<4x128xf32>
    %81 = arith.mulf %80, %73 : vector<4x128xf32>
    %82 = arith.addf %63, %81 : vector<4x128xf32>
    %83 = vector.broadcast %69 : vector<1x128xf32> to vector<4x128xf32>
    %84 = arith.mulf %83, %71 : vector<4x128xf32>
    %85 = arith.addf %82, %84 : vector<4x128xf32>
    %c0_60 = arith.constant 0 : index
    %c0_61 = arith.constant 0 : index
    %c0_62 = arith.constant 0 : index
    %c0_63 = arith.constant 0 : index
    %86 = vector.load %arg3[%c0_60, %c0_61, %c0_62, %c0_63] : memref<1x2x4x128xf32, #tpu.memory_space<vmem>>, vector<1x1x4x128xf32>
    %87 = vector.shape_cast %86 : vector<1x1x4x128xf32> to vector<4x128xf32>
    %88 = vector.shape_cast %79 : vector<4x128xf32> to vector<1x1x4x128xf32>
    tpu.vector_store %arg3[%c0_60, %c0_61, %c0_62, %c0_63], %88 {strides = array<i32>} : memref<1x2x4x128xf32, #tpu.memory_space<vmem>>, vector<1x1x4x128xf32>,
    %c0_64 = arith.constant 0 : index
    %c1_65 = arith.constant 1 : index
    %c0_66 = arith.constant 0 : index
    %c0_67 = arith.constant 0 : index
    %89 = vector.load %arg3[%c0_64, %c1_65, %c0_66, %c0_67] : memref<1x2x4x128xf32, #tpu.memory_space<vmem>>, vector<1x1x4x128xf32>
    %90 = vector.shape_cast %89 : vector<1x1x4x128xf32> to vector<4x128xf32>
    %91 = vector.shape_cast %85 : vector<4x128xf32> to vector<1x1x4x128xf32>
    tpu.vector_store %arg3[%c0_64, %c1_65, %c0_66, %c0_67], %91 {strides = array<i32>} : memref<1x2x4x128xf32, #tpu.memory_space<vmem>>, vector<1x1x4x128xf32>,
    return
  }
  func.func @transform_0(%arg0: i32) -> (i32, i32, i32, i32) {
    %c0_i32 = arith.constant 0 : i32
    %c0_i32_0 = arith.constant 0 : i32
    %c0_i32_1 = arith.constant 0 : i32
    %c0_i32_2 = arith.constant 0 : i32
    return %arg0, %c0_i32, %c0_i32_0, %c0_i32_1 : i32, i32, i32, i32
  }
  func.func @transform_1(%arg0: i32) -> (i32, i32, i32, i32) {
    %c0_i32 = arith.constant 0 : i32
    %c0_i32_0 = arith.constant 0 : i32
    %c0_i32_1 = arith.constant 0 : i32
    %c0_i32_2 = arith.constant 0 : i32
    %c0_i32_3 = arith.constant 0 : i32
    return %c0_i32, %c0_i32_0, %c0_i32_1, %c0_i32_2 : i32, i32, i32, i32
  }
  func.func @transform_2(%arg0: i32) -> (i32, i32, i32, i32) {
    %c0_i32 = arith.constant 0 : i32
    %c0_i32_0 = arith.constant 0 : i32
    %c0_i32_1 = arith.constant 0 : i32
    %c0_i32_2 = arith.constant 0 : i32
    return %arg0, %c0_i32, %c0_i32_0, %c0_i32_1 : i32, i32, i32, i32
  }
}

module attributes {stable_mosaic.version = 11 : i64} {
  func.func @kernel(%arg0: i32, %arg1: memref<1x2x4x128xf32, #tpu.memory_space<vmem>>, %arg2: memref<2x4x4x128xf32, #tpu.memory_space<vmem>>, %arg3: memref<1x2x4x128xf32, #tpu.memory_space<vmem>>) attributes {dimension_semantics = [#tpu.dimension_semantics<parallel>], iteration_bounds = array<i64: 2>, scalar_prefetch = 0 : i64, scratch_operands = 0 : i64, tpu.core_type = #tpu.core_type<tc>, window_params = [{transform_indices = @transform_0, window_bounds = array<i64: 1, 2, 4, 128>}, {pipeline_mode = #tpu.pipeline_mode<synchronous>, transform_indices = @transform_1, window_bounds = array<i64: 2, 4, 4, 128>}, {transform_indices = @transform_2, window_bounds = array<i64: 1, 2, 4, 128>}]} {
    %c0 = arith.constant 0 : index
    %c0_0 = arith.constant 0 : index
    %c0_1 = arith.constant 0 : index
    %c0_2 = arith.constant 0 : index
    %0 = vector.load %arg1[%c0, %c0_0, %c0_1, %c0_2] : memref<1x2x4x128xf32, #tpu.memory_space<vmem>>, vector<1x1x1x128xf32>
    %1 = vector.shape_cast %0 : vector<1x1x1x128xf32> to vector<128xf32>
    %2 = vector.shape_cast %1 : vector<128xf32> to vector<1x128xf32>
    %c0_3 = arith.constant 0 : index
    %c1 = arith.constant 1 : index
    %c0_4 = arith.constant 0 : index
    %c0_5 = arith.constant 0 : index
    %3 = vector.load %arg1[%c0_3, %c1, %c0_4, %c0_5] : memref<1x2x4x128xf32, #tpu.memory_space<vmem>>, vector<1x1x1x128xf32>
    %4 = vector.shape_cast %3 : vector<1x1x1x128xf32> to vector<128xf32>
    %5 = vector.shape_cast %4 : vector<128xf32> to vector<1x128xf32>
    %c0_6 = arith.constant 0 : index
    %c0_7 = arith.constant 0 : index
    %c0_8 = arith.constant 0 : index
    %c0_9 = arith.constant 0 : index
    %6 = vector.load %arg2[%c0_6, %c0_7, %c0_8, %c0_9] : memref<2x4x4x128xf32, #tpu.memory_space<vmem>>, vector<1x1x4x128xf32>
    %7 = vector.shape_cast %6 : vector<1x1x4x128xf32> to vector<4x128xf32>
    %c1_10 = arith.constant 1 : index
    %c0_11 = arith.constant 0 : index
    %c0_12 = arith.constant 0 : index
    %c0_13 = arith.constant 0 : index
    %8 = vector.load %arg2[%c1_10, %c0_11, %c0_12, %c0_13] : memref<2x4x4x128xf32, #tpu.memory_space<vmem>>, vector<1x1x4x128xf32>
    %9 = vector.shape_cast %8 : vector<1x1x4x128xf32> to vector<4x128xf32>
    %10 = vector.broadcast %2 : vector<1x128xf32> to vector<4x128xf32>
    %11 = arith.mulf %10, %7 : vector<4x128xf32>
    %12 = vector.broadcast %5 : vector<1x128xf32> to vector<4x128xf32>
    %13 = arith.mulf %12, %9 : vector<4x128xf32>
    %14 = arith.subf %11, %13 : vector<4x128xf32>
    %15 = vector.broadcast %2 : vector<1x128xf32> to vector<4x128xf32>
    %16 = arith.mulf %15, %9 : vector<4x128xf32>
    %17 = vector.broadcast %5 : vector<1x128xf32> to vector<4x128xf32>
    %18 = arith.mulf %17, %7 : vector<4x128xf32>
    %19 = arith.addf %16, %18 : vector<4x128xf32>
    %c0_14 = arith.constant 0 : index
    %c0_15 = arith.constant 0 : index
    %c1_16 = arith.constant 1 : index
    %c0_17 = arith.constant 0 : index
    %20 = vector.load %arg1[%c0_14, %c0_15, %c1_16, %c0_17] : memref<1x2x4x128xf32, #tpu.memory_space<vmem>>, vector<1x1x1x128xf32>
    %21 = vector.shape_cast %20 : vector<1x1x1x128xf32> to vector<128xf32>
    %22 = vector.shape_cast %21 : vector<128xf32> to vector<1x128xf32>
    %c0_18 = arith.constant 0 : index
    %c1_19 = arith.constant 1 : index
    %c1_20 = arith.constant 1 : index
    %c0_21 = arith.constant 0 : index
    %23 = vector.load %arg1[%c0_18, %c1_19, %c1_20, %c0_21] : memref<1x2x4x128xf32, #tpu.memory_space<vmem>>, vector<1x1x1x128xf32>
    %24 = vector.shape_cast %23 : vector<1x1x1x128xf32> to vector<128xf32>
    %25 = vector.shape_cast %24 : vector<128xf32> to vector<1x128xf32>
    %c0_22 = arith.constant 0 : index
    %c1_23 = arith.constant 1 : index
    %c0_24 = arith.constant 0 : index
    %c0_25 = arith.constant 0 : index
    %26 = vector.load %arg2[%c0_22, %c1_23, %c0_24, %c0_25] : memref<2x4x4x128xf32, #tpu.memory_space<vmem>>, vector<1x1x4x128xf32>
    %27 = vector.shape_cast %26 : vector<1x1x4x128xf32> to vector<4x128xf32>
    %c1_26 = arith.constant 1 : index
    %c1_27 = arith.constant 1 : index
    %c0_28 = arith.constant 0 : index
    %c0_29 = arith.constant 0 : index
    %28 = vector.load %arg2[%c1_26, %c1_27, %c0_28, %c0_29] : memref<2x4x4x128xf32, #tpu.memory_space<vmem>>, vector<1x1x4x128xf32>
    %29 = vector.shape_cast %28 : vector<1x1x4x128xf32> to vector<4x128xf32>
    %30 = vector.broadcast %22 : vector<1x128xf32> to vector<4x128xf32>
    %31 = arith.mulf %30, %27 : vector<4x128xf32>
    %32 = arith.addf %14, %31 : vector<4x128xf32>
    %33 = vector.broadcast %25 : vector<1x128xf32> to vector<4x128xf32>
    %34 = arith.mulf %33, %29 : vector<4x128xf32>
    %35 = arith.subf %32, %34 : vector<4x128xf32>
    %36 = vector.broadcast %22 : vector<1x128xf32> to vector<4x128xf32>
    %37 = arith.mulf %36, %29 : vector<4x128xf32>
    %38 = arith.addf %19, %37 : vector<4x128xf32>
    %39 = vector.broadcast %25 : vector<1x128xf32> to vector<4x128xf32>
    %40 = arith.mulf %39, %27 : vector<4x128xf32>
    %41 = arith.addf %38, %40 : vector<4x128xf32>
    %c0_30 = arith.constant 0 : index
    %c0_31 = arith.constant 0 : index
    %c2 = arith.constant 2 : index
    %c0_32 = arith.constant 0 : index
    %42 = vector.load %arg1[%c0_30, %c0_31, %c2, %c0_32] : memref<1x2x4x128xf32, #tpu.memory_space<vmem>>, vector<1x1x1x128xf32>
    %43 = vector.shape_cast %42 : vector<1x1x1x128xf32> to vector<128xf32>
    %44 = vector.shape_cast %43 : vector<128xf32> to vector<1x128xf32>
    %c0_33 = arith.constant 0 : index
    %c1_34 = arith.constant 1 : index
    %c2_35 = arith.constant 2 : index
    %c0_36 = arith.constant 0 : index
    %45 = vector.load %arg1[%c0_33, %c1_34, %c2_35, %c0_36] : memref<1x2x4x128xf32, #tpu.memory_space<vmem>>, vector<1x1x1x128xf32>
    %46 = vector.shape_cast %45 : vector<1x1x1x128xf32> to vector<128xf32>
    %47 = vector.shape_cast %46 : vector<128xf32> to vector<1x128xf32>
    %c0_37 = arith.constant 0 : index
    %c2_38 = arith.constant 2 : index
    %c0_39 = arith.constant 0 : index
    %c0_40 = arith.constant 0 : index
    %48 = vector.load %arg2[%c0_37, %c2_38, %c0_39, %c0_40] : memref<2x4x4x128xf32, #tpu.memory_space<vmem>>, vector<1x1x4x128xf32>
    %49 = vector.shape_cast %48 : vector<1x1x4x128xf32> to vector<4x128xf32>
    %c1_41 = arith.constant 1 : index
    %c2_42 = arith.constant 2 : index
    %c0_43 = arith.constant 0 : index
    %c0_44 = arith.constant 0 : index
    %50 = vector.load %arg2[%c1_41, %c2_42, %c0_43, %c0_44] : memref<2x4x4x128xf32, #tpu.memory_space<vmem>>, vector<1x1x4x128xf32>
    %51 = vector.shape_cast %50 : vector<1x1x4x128xf32> to vector<4x128xf32>
    %52 = vector.broadcast %44 : vector<1x128xf32> to vector<4x128xf32>
    %53 = arith.mulf %52, %49 : vector<4x128xf32>
    %54 = arith.addf %35, %53 : vector<4x128xf32>
    %55 = vector.broadcast %47 : vector<1x128xf32> to vector<4x128xf32>
    %56 = arith.mulf %55, %51 : vector<4x128xf32>
    %57 = arith.subf %54, %56 : vector<4x128xf32>
    %58 = vector.broadcast %44 : vector<1x128xf32> to vector<4x128xf32>
    %59 = arith.mulf %58, %51 : vector<4x128xf32>
    %60 = arith.addf %41, %59 : vector<4x128xf32>
    %61 = vector.broadcast %47 : vector<1x128xf32> to vector<4x128xf32>
    %62 = arith.mulf %61, %49 : vector<4x128xf32>
    %63 = arith.addf %60, %62 : vector<4x128xf32>
    %c0_45 = arith.constant 0 : index
    %c0_46 = arith.constant 0 : index
    %c3 = arith.constant 3 : index
    %c0_47 = arith.constant 0 : index
    %64 = vector.load %arg1[%c0_45, %c0_46, %c3, %c0_47] : memref<1x2x4x128xf32, #tpu.memory_space<vmem>>, vector<1x1x1x128xf32>
    %65 = vector.shape_cast %64 : vector<1x1x1x128xf32> to vector<128xf32>
    %66 = vector.shape_cast %65 : vector<128xf32> to vector<1x128xf32>
    %c0_48 = arith.constant 0 : index
    %c1_49 = arith.constant 1 : index
    %c3_50 = arith.constant 3 : index
    %c0_51 = arith.constant 0 : index
    %67 = vector.load %arg1[%c0_48, %c1_49, %c3_50, %c0_51] : memref<1x2x4x128xf32, #tpu.memory_space<vmem>>, vector<1x1x1x128xf32>
    %68 = vector.shape_cast %67 : vector<1x1x1x128xf32> to vector<128xf32>
    %69 = vector.shape_cast %68 : vector<128xf32> to vector<1x128xf32>
    %c0_52 = arith.constant 0 : index
    %c3_53 = arith.constant 3 : index
    %c0_54 = arith.constant 0 : index
    %c0_55 = arith.constant 0 : index
    %70 = vector.load %arg2[%c0_52, %c3_53, %c0_54, %c0_55] : memref<2x4x4x128xf32, #tpu.memory_space<vmem>>, vector<1x1x4x128xf32>
    %71 = vector.shape_cast %70 : vector<1x1x4x128xf32> to vector<4x128xf32>
    %c1_56 = arith.constant 1 : index
    %c3_57 = arith.constant 3 : index
    %c0_58 = arith.constant 0 : index
    %c0_59 = arith.constant 0 : index
    %72 = vector.load %arg2[%c1_56, %c3_57, %c0_58, %c0_59] : memref<2x4x4x128xf32, #tpu.memory_space<vmem>>, vector<1x1x4x128xf32>
    %73 = vector.shape_cast %72 : vector<1x1x4x128xf32> to vector<4x128xf32>
    %74 = vector.broadcast %66 : vector<1x128xf32> to vector<4x128xf32>
    %75 = arith.mulf %74, %71 : vector<4x128xf32>
    %76 = arith.addf %57, %75 : vector<4x128xf32>
    %77 = vector.broadcast %69 : vector<1x128xf32> to vector<4x128xf32>
    %78 = arith.mulf %77, %73 : vector<4x128xf32>
    %79 = arith.subf %76, %78 : vector<4x128xf32>
    %80 = vector.broadcast %66 : vector<1x128xf32> to vector<4x128xf32>
    %81 = arith.mulf %80, %73 : vector<4x128xf32>
    %82 = arith.addf %63, %81 : vector<4x128xf32>
    %83 = vector.broadcast %69 : vector<1x128xf32> to vector<4x128xf32>
    %84 = arith.mulf %83, %71 : vector<4x128xf32>
    %85 = arith.addf %82, %84 : vector<4x128xf32>
    %c0_60 = arith.constant 0 : index
    %c0_61 = arith.constant 0 : index
    %c0_62 = arith.constant 0 : index
    %c0_63 = arith.constant 0 : index
    %86 = vector.load %arg3[%c0_60, %c0_61, %c0_62, %c0_63] : memref<1x2x4x128xf32, #tpu.memory_space<vmem>>, vector<1x1x4x128xf32>
    %87 = vector.shape_cast %86 : vector<1x1x4x128xf32> to vector<4x128xf32>
    %88 = vector.shape_cast %79 : vector<4x128xf32> to vector<1x1x4x128xf32>
    tpu.vector_store %arg3[%c0_60, %c0_61, %c0_62, %c0_63], %88 {strides = array<i32>} : memref<1x2x4x128xf32, #tpu.memory_space<vmem>>, vector<1x1x4x128xf32>,
    %c0_64 = arith.constant 0 : index
    %c1_65 = arith.constant 1 : index
    %c0_66 = arith.constant 0 : index
    %c0_67 = arith.constant 0 : index
    %89 = vector.load %arg3[%c0_64, %c1_65, %c0_66, %c0_67] : memref<1x2x4x128xf32, #tpu.memory_space<vmem>>, vector<1x1x4x128xf32>
    %90 = vector.shape_cast %89 : vector<1x1x4x128xf32> to vector<4x128xf32>
    %91 = vector.shape_cast %85 : vector<4x128xf32> to vector<1x1x4x128xf32>
    tpu.vector_store %arg3[%c0_64, %c1_65, %c0_66, %c0_67], %91 {strides = array<i32>} : memref<1x2x4x128xf32, #tpu.memory_space<vmem>>, vector<1x1x4x128xf32>,
    return
  }
  func.func @transform_0(%arg0: i32) -> (i32, i32, i32, i32) {
    %c0_i32 = arith.constant 0 : i32
    %c0_i32_0 = arith.constant 0 : i32
    %c0_i32_1 = arith.constant 0 : i32
    %c0_i32_2 = arith.constant 0 : i32
    return %arg0, %c0_i32, %c0_i32_0, %c0_i32_1 : i32, i32, i32, i32
  }
  func.func @transform_1(%arg0: i32) -> (i32, i32, i32, i32) {
    %c0_i32 = arith.constant 0 : i32
    %c0_i32_0 = arith.constant 0 : i32
    %c0_i32_1 = arith.constant 0 : i32
    %c0_i32_2 = arith.constant 0 : i32
    %c0_i32_3 = arith.constant 0 : i32
    return %c0_i32, %c0_i32_0, %c0_i32_1, %c0_i32_2 : i32, i32, i32, i32
  }
  func.func @transform_2(%arg0: i32) -> (i32, i32, i32, i32) {
    %c0_i32 = arith.constant 0 : i32
    %c0_i32_0 = arith.constant 0 : i32
    %c0_i32_1 = arith.constant 0 : i32
    %c0_i32_2 = arith.constant 0 : i32
    return %arg0, %c0_i32, %c0_i32_0, %c0_i32_1 : i32, i32, i32, i32
  }
}

</mosaic_0001>

<llo_original>
// kernel: tpu_custom_call.1
$region0: #{tpu_custom_call.1}
  #allocation0 [shape = 'u32[]', space=smem, size = 0x4, offset = 0x4, fixed_abs, tag = 'smem constant byte address 0x4 - core index']
  #allocation1 [shape = 'u32[72,128]{1,0:T(1,128)}', space=vmem, size = 0x9000, scoped, tag = 'internal scratch']
  %s0 = inlined_call_operand.hbm [shape: f32[2,2,4,128], index: 0, kind: input, shape index: {}]
  %s1 = inlined_call_operand.hbm [shape: f32[2,4,4,128], index: 1, kind: input, shape index: {}]
  %s2 = inlined_call_operand.hbm [shape: f32[2,2,4,128], index: 2, kind: output, shape index: {}]
  %s3 = sld [smem:[#allocation0]]
  $region49: #{tpu_custom_call.1} parent=0
    _
  %s5 = ssub.s32 1, %s3
  %s6 = scalar_select 0, %s5, %s3
  $region1: #{tpu_custom_call.1} parent=0
    #allocation2 [shape = 'u8[8192]{0}', space=vmem, size = 0x2000, scoped, tag = 'input window, operand 0']
    #allocation3 [shape = 's32[2]{0}', space=sflag, size = 0x8, scoped, tag = 'scoped memory for tpu_custom_call.1']
    #allocation4 [shape = 's32[2]{0}', space=sflag, size = 0x8, scoped, tag = 'scoped memory for tpu_custom_call.1']
    #allocation5 [shape = 'u8[16384]{0}', space=vmem, size = 0x4000, scoped, tag = 'input window, operand 1, single buffered']
    #allocation6 [shape = 's32[1]{0}', space=sflag, size = 0x4, scoped, tag = 'scoped memory for tpu_custom_call.1']
    #allocation7 [shape = 'u8[8192]{0}', space=vmem, size = 0x2000, scoped, tag = 'output window, operand 0']
    %7 = vsyncpa [#allocation3], 0
    %s8 = scalar_lea.sflag [#allocation3], 1
    %9 = vsyncpa %s8, 0
    %10 = vsyncpa [#allocation6], 0
    %11 = vsyncpa [#allocation4], 0
    %s12 = scalar_lea.sflag [#allocation4], 1
    %13 = vsyncpa %s12, 0
    loop: start=0, step=1, limit=4
    $region2: #{tpu_custom_call.1} parent=1 // loop_pre_header
      _
    $region3: #{tpu_custom_call.1} parent=1 // loop_header
      %s15 = sphi 0, %s19
      %p16 = scmp.ge.s32.totalorder %s15, 4
      %s25 = sphi 0, %s27
      %s28 = sphi 0, %s25
      %s29 = sphi 0, %s28
      %s45 = sphi 0, %s29
      %s49 = sphi 0, %s49
      %s51 = sphi 0, %s49
      %s52 = sphi 0, %s51
      %s66 = sphi 0, %s52
      %s72 = sphi 0, %s74
      %s75 = sphi 0, %s72
      %s76 = sphi 0, %s75
      %s92 = sphi 0, %s76
    $region4: #{tpu_custom_call.1} parent=1 // loop_header_branch
      %18 = sbr.rel (%p16) target = $region8
    $region5: #{tpu_custom_call.1} parent=1 // loop_body
      %s20 = ssub.s32 %s15, 1
      %s21 = ssub.s32 %s15, 2
      %s22 = sadd.s32 %s15, 1
      %s23 = ssub.s32 %s15, %s22
      %p24 = scmp.eq.s32.totalorder %s23, 0
      %s26 = sadd.s32 %s25, 1
      %s27 = scalar_select %p24, %s25, %s26
      %p30 = pneg %p24
      %p31 = scmp.eq.s32.totalorder %s15, 1
      %p32 = por %p30, %p31
      %p33 = scmp.ne.s32.totalorder %s25, %s28
      %p34 = scmp.eq.s32.totalorder %s15, 0
      %p35 = por %p33, %p34
      %p36 = scmp.ne.s32.totalorder %s25, %s28
      %p37 = scmp.eq.s32.totalorder %s20, 1
      %p38 = por %p36, %p37
      %p39 = scmp.ne.s32.totalorder %s28, %s29
      %p40 = scmp.eq.s32.totalorder %s20, 0
      %p41 = por %p39, %p40
      %p42 = scmp.ne.s32.totalorder %s28, %s29
      %p43 = scmp.eq.s32.totalorder %s21, 1
      %p44 = por %p42, %p43
      %p46 = scmp.ne.s32.totalorder %s29, %s45
      %p47 = scmp.eq.s32.totalorder %s21, 0
      %p48 = por %p46, %p47
      %s50 = sadd.s32 %s49, 1
      %p53 = scmp.eq.s32.totalorder %s15, 1
      %p54 = scmp.ne.s32.totalorder %s49, %s51
      %p55 = scmp.eq.s32.totalorder %s15, 0
      %p56 = por %p54, %p55
      %p57 = scmp.ne.s32.totalorder %s49, %s51
      %p58 = scmp.eq.s32.totalorder %s20, 1
      %p59 = por %p57, %p58
      %p60 = scmp.ne.s32.totalorder %s51, %s52
      %p61 = scmp.eq.s32.totalorder %s20, 0
      %p62 = por %p60, %p61
      %p63 = scmp.ne.s32.totalorder %s51, %s52
      %p64 = scmp.eq.s32.totalorder %s21, 1
      %p65 = por %p63, %p64
      %p67 = scmp.ne.s32.totalorder %s52, %s66
      %p68 = scmp.eq.s32.totalorder %s21, 0
      %p69 = por %p67, %p68
      %s70 = ssub.s32 %s15, %s22
      %p71 = scmp.eq.s32.totalorder %s70, 0
      %s73 = sadd.s32 %s72, 1
      %s74 = scalar_select %p71, %s72, %s73
      %p77 = pneg %p71
      %p78 = scmp.eq.s32.totalorder %s15, 1
      %p79 = por %p77, %p78
      %p80 = scmp.ne.s32.totalorder %s72, %s75
      %p81 = scmp.eq.s32.totalorder %s15, 0
      %p82 = por %p80, %p81
      %p83 = scmp.ne.s32.totalorder %s72, %s75
      %p84 = scmp.eq.s32.totalorder %s20, 1
      %p85 = por %p83, %p84
      %p86 = scmp.ne.s32.totalorder %s75, %s76
      %p87 = scmp.eq.s32.totalorder %s20, 0
      %p88 = por %p86, %p87
      %p89 = scmp.ne.s32.totalorder %s75, %s76
      %p90 = scmp.eq.s32.totalorder %s21, 1
      %p91 = por %p89, %p90
      %p93 = scmp.ne.s32.totalorder %s76, %s92
      %p94 = scmp.eq.s32.totalorder %s21, 0
      %p95 = por %p93, %p94
      %p96 = scmp.le.s32.totalorder 1, %s15
      %p97 = scmp.lt.s32.totalorder %s15, 3
      %p98 = pnand %p96, %p97
      %p99 = pneg %p98
      // Predicated region
      $region9: #{tpu_custom_call.1} parent=5 // pred_check
        _
      $region10: #{tpu_custom_call.1} parent=5 // pred_check_branch
        %101 = sbr.rel (%p98) target = $region12
      $region11: #{tpu_custom_call.1} parent=5 // pred_region
        %s102 = ssub.s32 %s15, 1
        // Predicated region
        $region13: #{tpu_custom_call.1} parent=11 // pred_check
          %p103 = pneg %p62
        $region14: #{tpu_custom_call.1} parent=11 // pred_check_branch
          %105 = sbr.rel (%p103) target = $region16
        $region15: #{tpu_custom_call.1} parent=11 // pred_region
          %107 = vsyncadd [#allocation6], 0
          %s108 = sshll.u32 %s1, 4
          %s109 = int_to_ptr.hbm [resolvable:$true] %s108
          %s110 = sshll.u32 [#allocation5], 4
          %s111 = int_to_ptr.vmem [resolvable:$true] %s110
          %116 = dma.hbm_to_vmem [thread:$0]  %s109, 512, %s111, [#allocation6], 64, 64, 4
        $region16: #{tpu_custom_call.1} parent=11 // pred_fallthru
          _
      $region12: #{tpu_custom_call.1} parent=5 // pred_fallthru
        _
      %p117 = scmp.lt.s32.totalorder %s15, 2
      // Predicated region
      $region17: #{tpu_custom_call.1} parent=5 // pred_check
        %p118 = pneg %p117
      $region18: #{tpu_custom_call.1} parent=5 // pred_check_branch
        %120 = sbr.rel (%p118) target = $region20
      $region19: #{tpu_custom_call.1} parent=5 // pred_region
        // Predicated region
        $region21: #{tpu_custom_call.1} parent=19 // pred_check
          %p121 = pneg %p35
        $region22: #{tpu_custom_call.1} parent=19 // pred_check_branch
          %123 = sbr.rel (%p121) target = $region24
        $region23: #{tpu_custom_call.1} parent=19 // pred_region
          %s124 = sand.u32 %s25, 1
          %s125 = scalar_lea.sflag [#allocation3], %s124
          %s126 = sand.u32 %s25, 1
          %s127 = smul.addr %s126, 8
          %s128 = scalar_lea.vmem [#allocation2], %s127
          %130 = vsyncadd %s125, 0
          %s131 = smul.addr %s15, 2
          %s132 = smul.addr %s131, 4
          %s133 = scalar_lea.hbm %s0, %s132
          %s134 = sshll.u32 %s133, 4
          %s135 = int_to_ptr.hbm [resolvable:$true] %s134
          %s136 = sshll.u32 %s128, 4
          %s137 = int_to_ptr.vmem [resolvable:$true] %s136
          %142 = dma.hbm_to_vmem [thread:$0]  %s135, 128, %s137, %s125, 64, 64, 4
        $region24: #{tpu_custom_call.1} parent=19 // pred_fallthru
          _
      $region20: #{tpu_custom_call.1} parent=5 // pred_fallthru
        _
      %p143 = scmp.le.s32.totalorder 1, %s15
      %p144 = scmp.lt.s32.totalorder %s15, 3
      %p145 = pnand %p143, %p144
      %p146 = pneg %p145
      // Predicated region
      $region25: #{tpu_custom_call.1} parent=5 // pred_check
        _
      $region26: #{tpu_custom_call.1} parent=5 // pred_check_branch
        %148 = sbr.rel (%p145) target = $region28
      $region27: #{tpu_custom_call.1} parent=5 // pred_region
        %s149 = ssub.s32 %s15, 1
        %s150 = sand.u32 %s28, 1
        %s151 = scalar_lea.sflag [#allocation3], %s150
        %s152 = sand.u32 %s28, 1
        %s153 = smul.addr %s152, 8
        %s154 = scalar_lea.vmem [#allocation2], %s153
        // Predicated region
        $region29: #{tpu_custom_call.1} parent=27 // pred_check
          %p155 = pneg %p41
        $region30: #{tpu_custom_call.1} parent=27 // pred_check_branch
          %157 = sbr.rel (%p155) target = $region32
        $region31: #{tpu_custom_call.1} parent=27 // pred_region
          %159 = dma.done %s151, 128
        $region32: #{tpu_custom_call.1} parent=27 // pred_fallthru
          _
        // Predicated region
        $region33: #{tpu_custom_call.1} parent=27 // pred_check
          %p160 = pneg %p62
        $region34: #{tpu_custom_call.1} parent=27 // pred_check_branch
          %162 = sbr.rel (%p160) target = $region36
        $region35: #{tpu_custom_call.1} parent=27 // pred_region
          %164 = dma.done [#allocation6], 512
        $region36: #{tpu_custom_call.1} parent=27 // pred_fallthru
          _
        %s165 = sand.u32 %s28, 1
        %s166 = scalar_lea.sflag [#allocation3], %s165
        %s167 = sand.u32 %s28, 1
        %s168 = smul.addr %s167, 8
        %s169 = scalar_lea.vmem [#allocation2], %s168
        %p170 = pneg %p41
        %p171 = pneg %p38
        %p172 = pneg %p62
        %p173 = pneg %p59
        %p174 = pneg %p88
        %p175 = pneg %p85
        %s176 = sand.u32 %s75, 1
        %s177 = scalar_lea.sflag [#allocation4], %s176
        %s178 = sand.u32 %s75, 1
        %s179 = smul.addr %s178, 8
        %s180 = scalar_lea.vmem [#allocation7], %s179
        %v181 = vld [vmem:[%s154] sm:$0x1]
        %s182 = scalar_lea.vmem %s154, 4 [#allocation2]
        %v183 = vld [vmem:[%s182] sm:$0x1]
        %v184 = vld [vmem:[#allocation5] sm:$0xf]
        %s185 = scalar_lea.vmem [#allocation5], 16
        %v186 = vld [vmem:[%s185] sm:$0xf]
        %v187 = vperm.slane %v181, 0
        %v188 = vmul.f32 %v187, %v184
        %v189 = vperm.slane %v183, 0
        %v190 = vmul.f32 %v189, %v186
        %v191 = vsub.f32 %v188, %v190
        %v192 = vmul.f32 %v187, %v186
        %v193 = vmul.f32 %v189, %v184
        %v194 = vadd.f32 %v192, %v193
        %v195 = vld [vmem:[%s154 + $0x1] sm:$0x1]
        %v196 = vld [vmem:[%s182 + $0x1] sm:$0x1]
        %s197 = scalar_lea.vmem [#allocation5], 4
        %v198 = vld [vmem:[%s197] sm:$0xf]
        %s199 = scalar_lea.vmem [#allocation5], 20
        %v200 = vld [vmem:[%s199] sm:$0xf]
        %v201 = vperm.slane %v195, 0
        %v202 = vmul.f32 %v201, %v198
        %v203 = vadd.f32 %v191, %v202
        %v204 = vperm.slane %v196, 0
        %v205 = vmul.f32 %v204, %v200
        %v206 = vsub.f32 %v203, %v205
        %v207 = vmul.f32 %v201, %v200
        %v208 = vadd.f32 %v194, %v207
        %v209 = vmul.f32 %v204, %v198
        %v210 = vadd.f32 %v208, %v209
        %v211 = vld [vmem:[%s154 + $0x2] sm:$0x1]
        %v212 = vld [vmem:[%s182 + $0x2] sm:$0x1]
        %s213 = scalar_lea.vmem [#allocation5], 8
        %v214 = vld [vmem:[%s213] sm:$0xf]
        %s215 = scalar_lea.vmem [#allocation5], 24
        %v216 = vld [vmem:[%s215] sm:$0xf]
        %v217 = vperm.slane %v211, 0
        %v218 = vmul.f32 %v217, %v214
        %v219 = vadd.f32 %v206, %v218
        %v220 = vperm.slane %v212, 0
        %v221 = vmul.f32 %v220, %v216
        %v222 = vsub.f32 %v219, %v221
        %v223 = vmul.f32 %v217, %v216
        %v224 = vadd.f32 %v210, %v223
        %v225 = vmul.f32 %v220, %v214
        %v226 = vadd.f32 %v224, %v225
        %v227 = vld [vmem:[%s154 + $0x3] sm:$0x1]
        %v228 = vld [vmem:[%s182 + $0x3] sm:$0x1]
        %s229 = scalar_lea.vmem [#allocation5], 12
        %v230 = vld [vmem:[%s229] sm:$0xf]
        %s231 = scalar_lea.vmem [#allocation5], 28
        %v232 = vld [vmem:[%s231] sm:$0xf]
        %v233 = vperm.slane %v227, 0
        %v234 = vmul.f32 %v233, %v230
        %v235 = vadd.f32 %v222, %v234
        %v236 = vperm.slane %v228, 0
        %v237 = vmul.f32 %v236, %v232
        %v238 = vsub.f32 %v235, %v237
        %v239 = vmul.f32 %v233, %v232
        %v240 = vadd.f32 %v226, %v239
        %v241 = vmul.f32 %v236, %v230
        %v242 = vadd.f32 %v240, %v241
        %243 = vst [vmem:[%s180] sm:$0xf] %v238
        %s244 = scalar_lea.vmem %s180, 4 [#allocation7]
        %245 = vst [vmem:[%s244] sm:$0xf] %v242
        %s246 = sand.u32 %s75, 1
        %s247 = scalar_lea.sflag [#allocation4], %s246
        %s248 = sand.u32 %s75, 1
        %s249 = smul.addr %s248, 8
        %s250 = scalar_lea.vmem [#allocation7], %s249
        // Predicated region
        $region37: #{tpu_custom_call.1} parent=27 // pred_check
          %p251 = pneg %p85
        $region38: #{tpu_custom_call.1} parent=27 // pred_check_branch
          %253 = sbr.rel (%p251) target = $region40
        $region39: #{tpu_custom_call.1} parent=27 // pred_region
          %255 = vsyncadd %s247, 0
          %s256 = smul.addr %s20, 2
          %s257 = smul.addr %s256, 4
          %s258 = scalar_lea.hbm %s2, %s257
          %s259 = sshll.u32 %s250, 4
          %s260 = int_to_ptr.vmem [resolvable:$true] %s259
          %s261 = sshll.u32 %s258, 4
          %s262 = int_to_ptr.hbm [resolvable:$true] %s261
          %267 = dma.vmem_to_hbm [thread:$0]  %s260, 128, %s262, %s247, 64, 64, 4
        $region40: #{tpu_custom_call.1} parent=27 // pred_fallthru
          _
      $region28: #{tpu_custom_call.1} parent=5 // pred_fallthru
        _
      %p268 = scmp.le.s32.totalorder 2, %s15
      // Predicated region
      $region41: #{tpu_custom_call.1} parent=5 // pred_check
        %p269 = pneg %p268
      $region42: #{tpu_custom_call.1} parent=5 // pred_check_branch
        %271 = sbr.rel (%p269) target = $region44
      $region43: #{tpu_custom_call.1} parent=5 // pred_region
        %s272 = ssub.s32 %s15, 2
        // Predicated region
        $region45: #{tpu_custom_call.1} parent=43 // pred_check
          %p273 = pneg %p91
        $region46: #{tpu_custom_call.1} parent=43 // pred_check_branch
          %275 = sbr.rel (%p273) target = $region48
        $region47: #{tpu_custom_call.1} parent=43 // pred_region
          %s276 = sand.u32 %s76, 1
          %s277 = scalar_lea.sflag [#allocation4], %s276
          %s278 = sand.u32 %s76, 1
          %s279 = smul.addr %s278, 8
          %s280 = scalar_lea.vmem [#allocation7], %s279
          %282 = dma.done %s277, 128
        $region48: #{tpu_custom_call.1} parent=43 // pred_fallthru
          _
      $region44: #{tpu_custom_call.1} parent=5 // pred_fallthru
        _
    $region6: #{tpu_custom_call.1} parent=1 // loop_footer
      %s19 = sadd.s32 1, %s15
    $region7: #{tpu_custom_call.1} parent=1 // loop_footer_branch
      %14 = sbr.rel target = $region3
    $region8: #{tpu_custom_call.1} parent=1 // loop_exit
      _
    %283 = vsyncpa [#allocation3], 1
    %s284 = scalar_lea.sflag [#allocation3], 1
    %285 = vsyncpa %s284, 1
    %286 = vsyncpa [#allocation6], 1
    %287 = vsyncpa [#allocation4], 1
    %s288 = scalar_lea.sflag [#allocation4], 1
    %289 = vsyncpa %s288, 1

// kernel: tpu_custom_call.1
$region0: #{tpu_custom_call.1}
  #allocation0 [shape = 'u32[]', space=smem, size = 0x4, offset = 0x4, fixed_abs, tag = 'smem constant byte address 0x4 - core index']
  #allocation1 [shape = 'u32[72,128]{1,0:T(1,128)}', space=vmem, size = 0x9000, scoped, tag = 'internal scratch']
  %s0 = inlined_call_operand.hbm [shape: f32[2,2,4,128], index: 0, kind: input, shape index: {}]
  %s1 = inlined_call_operand.hbm [shape: f32[2,4,4,128], index: 1, kind: input, shape index: {}]
  %s2 = inlined_call_operand.hbm [shape: f32[2,2,4,128], index: 2, kind: output, shape index: {}]
  %s3 = sld [smem:[#allocation0]]
  $region49: #{tpu_custom_call.1} parent=0
    _
  %s5 = ssub.s32 1, %s3
  %s6 = scalar_select 0, %s5, %s3
  $region1: #{tpu_custom_call.1} parent=0
    #allocation2 [shape = 'u8[8192]{0}', space=vmem, size = 0x2000, scoped, tag = 'input window, operand 0']
    #allocation3 [shape = 's32[2]{0}', space=sflag, size = 0x8, scoped, tag = 'scoped memory for tpu_custom_call.1']
    #allocation4 [shape = 's32[2]{0}', space=sflag, size = 0x8, scoped, tag = 'scoped memory for tpu_custom_call.1']
    #allocation5 [shape = 'u8[16384]{0}', space=vmem, size = 0x4000, scoped, tag = 'input window, operand 1, single buffered']
    #allocation6 [shape = 's32[1]{0}', space=sflag, size = 0x4, scoped, tag = 'scoped memory for tpu_custom_call.1']
    #allocation7 [shape = 'u8[8192]{0}', space=vmem, size = 0x2000, scoped, tag = 'output window, operand 0']
    %7 = vsyncpa [#allocation3], 0
    %s8 = scalar_lea.sflag [#allocation3], 1
    %9 = vsyncpa %s8, 0
    %10 = vsyncpa [#allocation6], 0
    %11 = vsyncpa [#allocation4], 0
    %s12 = scalar_lea.sflag [#allocation4], 1
    %13 = vsyncpa %s12, 0
    loop: start=0, step=1, limit=4
    $region2: #{tpu_custom_call.1} parent=1 // loop_pre_header
      _
    $region3: #{tpu_custom_call.1} parent=1 // loop_header
      %s15 = sphi 0, %s19
      %p16 = scmp.ge.s32.totalorder %s15, 4
      %s25 = sphi 0, %s27
      %s28 = sphi 0, %s25
      %s29 = sphi 0, %s28
      %s45 = sphi 0, %s29
      %s49 = sphi 0, %s49
      %s51 = sphi 0, %s49
      %s52 = sphi 0, %s51
      %s66 = sphi 0, %s52
      %s72 = sphi 0, %s74
      %s75 = sphi 0, %s72
      %s76 = sphi 0, %s75
      %s92 = sphi 0, %s76
    $region4: #{tpu_custom_call.1} parent=1 // loop_header_branch
      %18 = sbr.rel (%p16) target = $region8
    $region5: #{tpu_custom_call.1} parent=1 // loop_body
      %s20 = ssub.s32 %s15, 1
      %s21 = ssub.s32 %s15, 2
      %s22 = sadd.s32 %s15, 1
      %s23 = ssub.s32 %s15, %s22
      %p24 = scmp.eq.s32.totalorder %s23, 0
      %s26 = sadd.s32 %s25, 1
      %s27 = scalar_select %p24, %s25, %s26
      %p30 = pneg %p24
      %p31 = scmp.eq.s32.totalorder %s15, 1
      %p32 = por %p30, %p31
      %p33 = scmp.ne.s32.totalorder %s25, %s28
      %p34 = scmp.eq.s32.totalorder %s15, 0
      %p35 = por %p33, %p34
      %p36 = scmp.ne.s32.totalorder %s25, %s28
      %p37 = scmp.eq.s32.totalorder %s20, 1
      %p38 = por %p36, %p37
      %p39 = scmp.ne.s32.totalorder %s28, %s29
      %p40 = scmp.eq.s32.totalorder %s20, 0
      %p41 = por %p39, %p40
      %p42 = scmp.ne.s32.totalorder %s28, %s29
      %p43 = scmp.eq.s32.totalorder %s21, 1
      %p44 = por %p42, %p43
      %p46 = scmp.ne.s32.totalorder %s29, %s45
      %p47 = scmp.eq.s32.totalorder %s21, 0
      %p48 = por %p46, %p47
      %s50 = sadd.s32 %s49, 1
      %p53 = scmp.eq.s32.totalorder %s15, 1
      %p54 = scmp.ne.s32.totalorder %s49, %s51
      %p55 = scmp.eq.s32.totalorder %s15, 0
      %p56 = por %p54, %p55
      %p57 = scmp.ne.s32.totalorder %s49, %s51
      %p58 = scmp.eq.s32.totalorder %s20, 1
      %p59 = por %p57, %p58
      %p60 = scmp.ne.s32.totalorder %s51, %s52
      %p61 = scmp.eq.s32.totalorder %s20, 0
      %p62 = por %p60, %p61
      %p63 = scmp.ne.s32.totalorder %s51, %s52
      %p64 = scmp.eq.s32.totalorder %s21, 1
      %p65 = por %p63, %p64
      %p67 = scmp.ne.s32.totalorder %s52, %s66
      %p68 = scmp.eq.s32.totalorder %s21, 0
      %p69 = por %p67, %p68
      %s70 = ssub.s32 %s15, %s22
      %p71 = scmp.eq.s32.totalorder %s70, 0
      %s73 = sadd.s32 %s72, 1
      %s74 = scalar_select %p71, %s72, %s73
      %p77 = pneg %p71
      %p78 = scmp.eq.s32.totalorder %s15, 1
      %p79 = por %p77, %p78
      %p80 = scmp.ne.s32.totalorder %s72, %s75
      %p81 = scmp.eq.s32.totalorder %s15, 0
      %p82 = por %p80, %p81
      %p83 = scmp.ne.s32.totalorder %s72, %s75
      %p84 = scmp.eq.s32.totalorder %s20, 1
      %p85 = por %p83, %p84
      %p86 = scmp.ne.s32.totalorder %s75, %s76
      %p87 = scmp.eq.s32.totalorder %s20, 0
      %p88 = por %p86, %p87
      %p89 = scmp.ne.s32.totalorder %s75, %s76
      %p90 = scmp.eq.s32.totalorder %s21, 1
      %p91 = por %p89, %p90
      %p93 = scmp.ne.s32.totalorder %s76, %s92
      %p94 = scmp.eq.s32.totalorder %s21, 0
      %p95 = por %p93, %p94
      %p96 = scmp.le.s32.totalorder 1, %s15
      %p97 = scmp.lt.s32.totalorder %s15, 3
      %p98 = pnand %p96, %p97
      %p99 = pneg %p98
      // Predicated region
      $region9: #{tpu_custom_call.1} parent=5 // pred_check
        _
      $region10: #{tpu_custom_call.1} parent=5 // pred_check_branch
        %101 = sbr.rel (%p98) target = $region12
      $region11: #{tpu_custom_call.1} parent=5 // pred_region
        %s102 = ssub.s32 %s15, 1
        // Predicated region
        $region13: #{tpu_custom_call.1} parent=11 // pred_check
          %p103 = pneg %p62
        $region14: #{tpu_custom_call.1} parent=11 // pred_check_branch
          %105 = sbr.rel (%p103) target = $region16
        $region15: #{tpu_custom_call.1} parent=11 // pred_region
          %107 = vsyncadd [#allocation6], 0
          %s108 = sshll.u32 %s1, 4
          %s109 = int_to_ptr.hbm [resolvable:$true] %s108
          %s110 = sshll.u32 [#allocation5], 4
          %s111 = int_to_ptr.vmem [resolvable:$true] %s110
          %116 = dma.hbm_to_vmem [thread:$0]  %s109, 512, %s111, [#allocation6], 64, 64, 4
        $region16: #{tpu_custom_call.1} parent=11 // pred_fallthru
          _
      $region12: #{tpu_custom_call.1} parent=5 // pred_fallthru
        _
      %p117 = scmp.lt.s32.totalorder %s15, 2
      // Predicated region
      $region17: #{tpu_custom_call.1} parent=5 // pred_check
        %p118 = pneg %p117
      $region18: #{tpu_custom_call.1} parent=5 // pred_check_branch
        %120 = sbr.rel (%p118) target = $region20
      $region19: #{tpu_custom_call.1} parent=5 // pred_region
        // Predicated region
        $region21: #{tpu_custom_call.1} parent=19 // pred_check
          %p121 = pneg %p35
        $region22: #{tpu_custom_call.1} parent=19 // pred_check_branch
          %123 = sbr.rel (%p121) target = $region24
        $region23: #{tpu_custom_call.1} parent=19 // pred_region
          %s124 = sand.u32 %s25, 1
          %s125 = scalar_lea.sflag [#allocation3], %s124
          %s126 = sand.u32 %s25, 1
          %s127 = smul.addr %s126, 8
          %s128 = scalar_lea.vmem [#allocation2], %s127
          %130 = vsyncadd %s125, 0
          %s131 = smul.addr %s15, 2
          %s132 = smul.addr %s131, 4
          %s133 = scalar_lea.hbm %s0, %s132
          %s134 = sshll.u32 %s133, 4
          %s135 = int_to_ptr.hbm [resolvable:$true] %s134
          %s136 = sshll.u32 %s128, 4
          %s137 = int_to_ptr.vmem [resolvable:$true] %s136
          %142 = dma.hbm_to_vmem [thread:$0]  %s135, 128, %s137, %s125, 64, 64, 4
        $region24: #{tpu_custom_call.1} parent=19 // pred_fallthru
          _
      $region20: #{tpu_custom_call.1} parent=5 // pred_fallthru
        _
      %p143 = scmp.le.s32.totalorder 1, %s15
      %p144 = scmp.lt.s32.totalorder %s15, 3
      %p145 = pnand %p143, %p144
      %p146 = pneg %p145
      // Predicated region
      $region25: #{tpu_custom_call.1} parent=5 // pred_check
        _
      $region26: #{tpu_custom_call.1} parent=5 // pred_check_branch
        %148 = sbr.rel (%p145) target = $region28
      $region27: #{tpu_custom_call.1} parent=5 // pred_region
        %s149 = ssub.s32 %s15, 1
        %s150 = sand.u32 %s28, 1
        %s151 = scalar_lea.sflag [#allocation3], %s150
        %s152 = sand.u32 %s28, 1
        %s153 = smul.addr %s152, 8
        %s154 = scalar_lea.vmem [#allocation2], %s153
        // Predicated region
        $region29: #{tpu_custom_call.1} parent=27 // pred_check
          %p155 = pneg %p41
        $region30: #{tpu_custom_call.1} parent=27 // pred_check_branch
          %157 = sbr.rel (%p155) target = $region32
        $region31: #{tpu_custom_call.1} parent=27 // pred_region
          %159 = dma.done %s151, 128
        $region32: #{tpu_custom_call.1} parent=27 // pred_fallthru
          _
        // Predicated region
        $region33: #{tpu_custom_call.1} parent=27 // pred_check
          %p160 = pneg %p62
        $region34: #{tpu_custom_call.1} parent=27 // pred_check_branch
          %162 = sbr.rel (%p160) target = $region36
        $region35: #{tpu_custom_call.1} parent=27 // pred_region
          %164 = dma.done [#allocation6], 512
        $region36: #{tpu_custom_call.1} parent=27 // pred_fallthru
          _
        %s165 = sand.u32 %s28, 1
        %s166 = scalar_lea.sflag [#allocation3], %s165
        %s167 = sand.u32 %s28, 1
        %s168 = smul.addr %s167, 8
        %s169 = scalar_lea.vmem [#allocation2], %s168
        %p170 = pneg %p41
        %p171 = pneg %p38
        %p172 = pneg %p62
        %p173 = pneg %p59
        %p174 = pneg %p88
        %p175 = pneg %p85
        %s176 = sand.u32 %s75, 1
        %s177 = scalar_lea.sflag [#allocation4], %s176
        %s178 = sand.u32 %s75, 1
        %s179 = smul.addr %s178, 8
        %s180 = scalar_lea.vmem [#allocation7], %s179
        %v181 = vld [vmem:[%s154] sm:$0x1]
        %s182 = scalar_lea.vmem %s154, 4 [#allocation2]
        %v183 = vld [vmem:[%s182] sm:$0x1]
        %v184 = vld [vmem:[#allocation5] sm:$0xf]
        %s185 = scalar_lea.vmem [#allocation5], 16
        %v186 = vld [vmem:[%s185] sm:$0xf]
        %v187 = vperm.slane %v181, 0
        %v188 = vmul.f32 %v187, %v184
        %v189 = vperm.slane %v183, 0
        %v190 = vmul.f32 %v189, %v186
        %v191 = vsub.f32 %v188, %v190
        %v192 = vmul.f32 %v187, %v186
        %v193 = vmul.f32 %v189, %v184
        %v194 = vadd.f32 %v192, %v193
        %v195 = vld [vmem:[%s154 + $0x1] sm:$0x1]
        %v196 = vld [vmem:[%s182 + $0x1] sm:$0x1]
        %s197 = scalar_lea.vmem [#allocation5], 4
        %v198 = vld [vmem:[%s197] sm:$0xf]
        %s199 = scalar_lea.vmem [#allocation5], 20
        %v200 = vld [vmem:[%s199] sm:$0xf]
        %v201 = vperm.slane %v195, 0
        %v202 = vmul.f32 %v201, %v198
        %v203 = vadd.f32 %v191, %v202
        %v204 = vperm.slane %v196, 0
        %v205 = vmul.f32 %v204, %v200
        %v206 = vsub.f32 %v203, %v205
        %v207 = vmul.f32 %v201, %v200
        %v208 = vadd.f32 %v194, %v207
        %v209 = vmul.f32 %v204, %v198
        %v210 = vadd.f32 %v208, %v209
        %v211 = vld [vmem:[%s154 + $0x2] sm:$0x1]
        %v212 = vld [vmem:[%s182 + $0x2] sm:$0x1]
        %s213 = scalar_lea.vmem [#allocation5], 8
        %v214 = vld [vmem:[%s213] sm:$0xf]
        %s215 = scalar_lea.vmem [#allocation5], 24
        %v216 = vld [vmem:[%s215] sm:$0xf]
        %v217 = vperm.slane %v211, 0
        %v218 = vmul.f32 %v217, %v214
        %v219 = vadd.f32 %v206, %v218
        %v220 = vperm.slane %v212, 0
        %v221 = vmul.f32 %v220, %v216
        %v222 = vsub.f32 %v219, %v221
        %v223 = vmul.f32 %v217, %v216
        %v224 = vadd.f32 %v210, %v223
        %v225 = vmul.f32 %v220, %v214
        %v226 = vadd.f32 %v224, %v225
        %v227 = vld [vmem:[%s154 + $0x3] sm:$0x1]
        %v228 = vld [vmem:[%s182 + $0x3] sm:$0x1]
        %s229 = scalar_lea.vmem [#allocation5], 12
        %v230 = vld [vmem:[%s229] sm:$0xf]
        %s231 = scalar_lea.vmem [#allocation5], 28
        %v232 = vld [vmem:[%s231] sm:$0xf]
        %v233 = vperm.slane %v227, 0
        %v234 = vmul.f32 %v233, %v230
        %v235 = vadd.f32 %v222, %v234
        %v236 = vperm.slane %v228, 0
        %v237 = vmul.f32 %v236, %v232
        %v238 = vsub.f32 %v235, %v237
        %v239 = vmul.f32 %v233, %v232
        %v240 = vadd.f32 %v226, %v239
        %v241 = vmul.f32 %v236, %v230
        %v242 = vadd.f32 %v240, %v241
        %243 = vst [vmem:[%s180] sm:$0xf] %v238
        %s244 = scalar_lea.vmem %s180, 4 [#allocation7]
        %245 = vst [vmem:[%s244] sm:$0xf] %v242
        %s246 = sand.u32 %s75, 1
        %s247 = scalar_lea.sflag [#allocation4], %s246
        %s248 = sand.u32 %s75, 1
        %s249 = smul.addr %s248, 8
        %s250 = scalar_lea.vmem [#allocation7], %s249
        // Predicated region
        $region37: #{tpu_custom_call.1} parent=27 // pred_check
          %p251 = pneg %p85
        $region38: #{tpu_custom_call.1} parent=27 // pred_check_branch
          %253 = sbr.rel (%p251) target = $region40
        $region39: #{tpu_custom_call.1} parent=27 // pred_region
          %255 = vsyncadd %s247, 0
          %s256 = smul.addr %s20, 2
          %s257 = smul.addr %s256, 4
          %s258 = scalar_lea.hbm %s2, %s257
          %s259 = sshll.u32 %s250, 4
          %s260 = int_to_ptr.vmem [resolvable:$true] %s259
          %s261 = sshll.u32 %s258, 4
          %s262 = int_to_ptr.hbm [resolvable:$true] %s261
          %267 = dma.vmem_to_hbm [thread:$0]  %s260, 128, %s262, %s247, 64, 64, 4
        $region40: #{tpu_custom_call.1} parent=27 // pred_fallthru
          _
      $region28: #{tpu_custom_call.1} parent=5 // pred_fallthru
        _
      %p268 = scmp.le.s32.totalorder 2, %s15
      // Predicated region
      $region41: #{tpu_custom_call.1} parent=5 // pred_check
        %p269 = pneg %p268
      $region42: #{tpu_custom_call.1} parent=5 // pred_check_branch
        %271 = sbr.rel (%p269) target = $region44
      $region43: #{tpu_custom_call.1} parent=5 // pred_region
        %s272 = ssub.s32 %s15, 2
        // Predicated region
        $region45: #{tpu_custom_call.1} parent=43 // pred_check
          %p273 = pneg %p91
        $region46: #{tpu_custom_call.1} parent=43 // pred_check_branch
          %275 = sbr.rel (%p273) target = $region48
        $region47: #{tpu_custom_call.1} parent=43 // pred_region
          %s276 = sand.u32 %s76, 1
          %s277 = scalar_lea.sflag [#allocation4], %s276
          %s278 = sand.u32 %s76, 1
          %s279 = smul.addr %s278, 8
          %s280 = scalar_lea.vmem [#allocation7], %s279
          %282 = dma.done %s277, 128
        $region48: #{tpu_custom_call.1} parent=43 // pred_fallthru
          _
      $region44: #{tpu_custom_call.1} parent=5 // pred_fallthru
        _
    $region6: #{tpu_custom_call.1} parent=1 // loop_footer
      %s19 = sadd.s32 1, %s15
    $region7: #{tpu_custom_call.1} parent=1 // loop_footer_branch
      %14 = sbr.rel target = $region3
    $region8: #{tpu_custom_call.1} parent=1 // loop_exit
      _
    %283 = vsyncpa [#allocation3], 1
    %s284 = scalar_lea.sflag [#allocation3], 1
    %285 = vsyncpa %s284, 1
    %286 = vsyncpa [#allocation6], 1
    %287 = vsyncpa [#allocation4], 1
    %s288 = scalar_lea.sflag [#allocation4], 1
    %289 = vsyncpa %s288, 1

</llo_original>
